<compile_context>
chip_gen: v5e
topology: v5e:2x2
jax: 0.10.0
libtpu: 0.0.40
codegen_flags: <defaults>
</compile_context>

<pallas_src>
import jax
import jax.numpy as jnp
from jax.experimental import pallas as pl
from jax.experimental.pallas import tpu as pltpu

_LANES = 128
_ACC_ROWS = 32  # accumulator / output-block height: 4 f32 vregs, and a
                # multiple of both f32 (8) and bf16 (16) sublane packing.


def _cdiv(a, b):
    return -(-a // b)


def _tc_config():
    """Return (num_cores, use_core_parallel) for the local TPU generation."""
    try:
        kind = jax.devices()[0].device_kind.lower()
    except Exception:
        return 1, False
    if "v7" in kind or "7x" in kind:
        return 2, True        # v7x: 2 TensorCores; shard via CORE_PARALLEL.
    if "v4" in kind or "v5p" in kind:
        return 2, False       # megacore: plain "parallel" shards the axis.
    return 1, False           # v5e / v6e / unknown: single TensorCore.


def _make_mse_rel_kernel(tile_rows, rows, blocks_per_core, need_mask):
    chunks = tile_rows // _ACC_ROWS

    def kernel(rel_ref, usr_ref, wt_ref, dur_ref, out_ref):
        c = pl.program_id(0)
        i = pl.program_id(1)

        @pl.when(i == 0)
        def _():
            out_ref[...] = jnp.zeros_like(out_ref)

        rel = rel_ref[...].astype(jnp.float32)
        usr = usr_ref[...].astype(jnp.float32)
        wt = wt_ref[...].astype(jnp.float32)
        dur = dur_ref[...].astype(jnp.float32)

        s = jax.nn.sigmoid(rel)
        raw = usr * jnp.log((1.0 + s) / (1.0 - s + 0.001))
        raw = jnp.maximum(raw, 0.0)          # == raw * (raw > 0)
        clip = jnp.minimum(raw, dur)         # == raw*(raw<dur) + dur*(raw>=dur)
        diff = clip - wt
        sq = diff * diff

        if need_mask:
            # Mask rows past the true extent (partial last tile / clamped
            # blocks).  jnp.where discards any garbage (NaN/Inf) safely.
            row_start = (c * blocks_per_core + i) * tile_rows
            row_idx = row_start + jax.lax.broadcasted_iota(
                jnp.int32, (tile_rows, _LANES), 0)
            sq = jnp.where(row_idx < rows, sq, 0.0)

        # Accumulate into 4 independent f32 vregs (32 sublanes): pure VALU,
        # hidden under the input DMAs.  Final cross-lane reduce is outside.
        out_ref[...] += jnp.sum(sq.reshape(chunks, _ACC_ROWS, _LANES), axis=0)

    return kernel


def mse_rel_pallas(rel_score, usr_score, wt, duration, *, tile_rows=4096,
                   num_cores=None):
    """Scalar MSE_rel loss (float32), matching the PyTorch reference."""
    assert rel_score.shape == usr_score.shape == wt.shape == duration.shape
    total = int(rel_score.size)
    assert total > 0

    if num_cores is None:
        num_cores, use_core_parallel = _tc_config()
    else:
        use_core_parallel = False

    flats = [x.reshape(-1) for x in (rel_score, usr_score, wt, duration)]

    rows_needed = _cdiv(total, _LANES)
    if total % _LANES == 0 and rows_needed >= _ACC_ROWS:
        rows = rows_needed                       # zero-copy fast path, no pad
    else:
        # Fallback for tiny / non-128-multiple inputs: pad only to the next
        # lane multiple (>= one 32x128 slab).  Zero padding of ALL four inputs
        # contributes exactly 0 to the sum.
        rows = max(_ACC_ROWS, rows_needed)
        pad = rows * _LANES - total
        flats = [jnp.pad(x, (0, pad)) for x in flats]
    slabs = [x.reshape(rows, _LANES) for x in flats]

    per_core = _cdiv(rows, num_cores)
    tr = max(_ACC_ROWS,
             (min(tile_rows, per_core, rows) // _ACC_ROWS) * _ACC_ROWS)
    blocks_per_core = _cdiv(rows, num_cores * tr)
    last_block = _cdiv(rows, tr) - 1
    need_mask = (num_cores * blocks_per_core * tr) != rows

    def in_index(c, i):
        b = c * blocks_per_core + i
        if need_mask:
            b = jnp.minimum(b, last_block)   # never issue a fully-OOB DMA
        return (b, 0)

    in_spec = pl.BlockSpec((tr, _LANES), in_index)
    out_spec = pl.BlockSpec((_ACC_ROWS, _LANES), lambda c, i: (c, 0))

    if num_cores > 1 and use_core_parallel:
        lead = getattr(pltpu, "CORE_PARALLEL", pltpu.PARALLEL)
    else:
        lead = pltpu.PARALLEL
    semantics = (lead, pltpu.ARBITRARY)

    in_bytes = sum(x.dtype.itemsize for x in (rel_score, usr_score, wt, duration))
    cost = pl.CostEstimate(
        flops=12 * total,
        transcendentals=4 * total,
        bytes_accessed=total * in_bytes + num_cores * _ACC_ROWS * _LANES * 4,
    )

    partials = pl.pallas_call(
        _make_mse_rel_kernel(tr, rows, blocks_per_core, need_mask),
        out_shape=jax.ShapeDtypeStruct((num_cores * _ACC_ROWS, _LANES),
                                       jnp.float32),
        grid_spec=pltpu.PrefetchScalarGridSpec(
            num_scalar_prefetch=0,
            grid=(num_cores, blocks_per_core),
            in_specs=[in_spec, in_spec, in_spec, in_spec],
            out_specs=out_spec,
        ),
        compiler_params=pltpu.CompilerParams(
            dimension_semantics=semantics,
            vmem_limit_bytes=32 * 1024 * 1024,
        ),
        cost_estimate=cost,
    )(*slabs)

    return jnp.sum(partials) / jnp.float32(total)


def mse_rel_ref(rel_score, usr_score, wt, duration):
    s = jax.nn.sigmoid(rel_score.astype(jnp.float32))
    raw = usr_score.astype(jnp.float32) * jnp.log((1.0 + s) / (1.0 - s + 0.001))
    raw = raw * (raw > 0)
    dur = duration.astype(jnp.float32)
    clip = raw * (raw < dur) + dur * (raw >= dur)
    return jnp.mean(jnp.square(clip - wt.astype(jnp.float32)))


if __name__ == "__main__":
    key = jax.random.PRNGKey(0)

    def make_inputs(shape, key):
        k1, k2, k3, k4 = jax.random.split(key, 4)
        rel = jax.random.normal(k1, shape, dtype=jnp.float32)
        usr = jax.random.uniform(k2, shape, dtype=jnp.float32, minval=0.0, maxval=5.0)
        wt = jax.random.uniform(k3, shape, dtype=jnp.float32, minval=0.0, maxval=10.0)
        dur = jax.random.uniform(k4, shape, dtype=jnp.float32, minval=1.0, maxval=10.0)
        return rel, usr, wt, dur

    loss_fn = jax.jit(mse_rel_pallas)

    k_a, k_b, k_c = jax.random.split(key, 3)

    # batch=2, seq=8, hidden=128 -> 2048 elems (small fallback path).
    args_a = make_inputs((2, 8, 128), k_a)
    loss_a = jax.block_until_ready(loss_fn(*args_a))
    ref_a = mse_rel_ref(*args_a)
    assert jnp.allclose(loss_a, ref_a, rtol=1e-5, atol=1e-5), (loss_a, ref_a)

    # batch=4, seq=8, hidden=128 -> 4096 elems (zero-copy aligned fast path).
    args_b = make_inputs((4, 8, 128), k_b)
    loss_b = jax.block_until_ready(loss_fn(*args_b))
    ref_b = mse_rel_ref(*args_b)
    assert jnp.allclose(loss_b, ref_b, rtol=1e-5, atol=1e-5), (loss_b, ref_b)

    # Ragged case (not a multiple of 128) exercising the padded/masked path.
    args_c = make_inputs((3, 7, 13), k_c)
    loss_c = jax.block_until_ready(loss_fn(*args_c))
    ref_c = mse_rel_ref(*args_c)
    assert jnp.allclose(loss_c, ref_c, rtol=1e-5, atol=1e-5), (loss_c, ref_c)

    print("KERNEL_OK")
</pallas_src>

<mosaic_0001>
module attributes {stable_mosaic.version = 11 : i64} {
  func.func @kernel(%arg0: i32, %arg1: i32, %arg2: memref<32x128xf32, #tpu.memory_space<vmem>>, %arg3: memref<32x128xf32, #tpu.memory_space<vmem>>, %arg4: memref<32x128xf32, #tpu.memory_space<vmem>>, %arg5: memref<32x128xf32, #tpu.memory_space<vmem>>, %arg6: memref<32x128xf32, #tpu.memory_space<vmem>>) attributes {dimension_semantics = [#tpu.dimension_semantics<parallel>, #tpu.dimension_semantics<arbitrary>], iteration_bounds = array<i64: 1, 1>, scalar_prefetch = 0 : i64, scratch_operands = 0 : i64, tpu.core_type = #tpu.core_type<tc>, window_params = [{transform_indices = @transform_0, window_bounds = array<i64: 32, 128>}, {transform_indices = @transform_1, window_bounds = array<i64: 32, 128>}, {transform_indices = @transform_2, window_bounds = array<i64: 32, 128>}, {transform_indices = @transform_3, window_bounds = array<i64: 32, 128>}, {transform_indices = @transform_4, window_bounds = array<i64: 32, 128>}]} {
    %c0_i32 = arith.constant 0 : i32
    %0 = arith.cmpi eq, %arg1, %c0_i32 : i32
    %1 = arith.extui %0 : i1 to i32
    %c0_i32_0 = arith.constant 0 : i32
    %2 = arith.cmpi ne, %1, %c0_i32_0 : i32
    scf.if %2 {
      %cst_17 = arith.constant 0.000000e+00 : f32
      %31 = vector.broadcast %cst_17 : f32 to vector<32x128xf32>
      %c0_18 = arith.constant 0 : index
      %c0_19 = arith.constant 0 : index
      %32 = vector.load %arg6[%c0_18, %c0_19] : memref<32x128xf32, #tpu.memory_space<vmem>>, vector<32x128xf32>
      tpu.vector_store %arg6[%c0_18, %c0_19], %31 {strides = array<i32>} : memref<32x128xf32, #tpu.memory_space<vmem>>, vector<32x128xf32>,
    } else {
    }
    %c0 = arith.constant 0 : index
    %c0_1 = arith.constant 0 : index
    %3 = vector.load %arg2[%c0, %c0_1] : memref<32x128xf32, #tpu.memory_space<vmem>>, vector<32x128xf32>
    %c0_2 = arith.constant 0 : index
    %c0_3 = arith.constant 0 : index
    %4 = vector.load %arg3[%c0_2, %c0_3] : memref<32x128xf32, #tpu.memory_space<vmem>>, vector<32x128xf32>
    %c0_4 = arith.constant 0 : index
    %c0_5 = arith.constant 0 : index
    %5 = vector.load %arg4[%c0_4, %c0_5] : memref<32x128xf32, #tpu.memory_space<vmem>>, vector<32x128xf32>
    %c0_6 = arith.constant 0 : index
    %c0_7 = arith.constant 0 : index
    %6 = vector.load %arg5[%c0_6, %c0_7] : memref<32x128xf32, #tpu.memory_space<vmem>>, vector<32x128xf32>
    %7 = arith.negf %3 : vector<32x128xf32>
    %8 = math.exp %7 : vector<32x128xf32>
    %cst = arith.constant 1.000000e+00 : f32
    %9 = vector.broadcast %cst : f32 to vector<32x128xf32>
    %10 = arith.addf %9, %8 : vector<32x128xf32>
    %11 = arith.divf %9, %10 : vector<32x128xf32>
    %cst_8 = arith.constant 1.000000e+00 : f32
    %12 = vector.broadcast %cst_8 : f32 to vector<32x128xf32>
    %13 = arith.addf %12, %11 : vector<32x128xf32>
    %cst_9 = arith.constant 1.000000e+00 : f32
    %14 = vector.broadcast %cst_9 : f32 to vector<32x128xf32>
    %15 = arith.subf %14, %11 : vector<32x128xf32>
    %cst_10 = arith.constant 1.000000e-03 : f32
    %16 = vector.broadcast %cst_10 : f32 to vector<32x128xf32>
    %17 = arith.addf %15, %16 : vector<32x128xf32>
    %18 = arith.divf %13, %17 : vector<32x128xf32>
    %19 = math.log %18 : vector<32x128xf32>
    %20 = arith.mulf %4, %19 : vector<32x128xf32>
    %cst_11 = arith.constant 0.000000e+00 : f32
    %21 = vector.broadcast %cst_11 : f32 to vector<32x128xf32>
    %22 = arith.maximumf %20, %21 : vector<32x128xf32>
    %23 = arith.minimumf %22, %6 : vector<32x128xf32>
    %24 = arith.subf %23, %5 : vector<32x128xf32>
    %25 = arith.mulf %24, %24 : vector<32x128xf32>
    %c0_12 = arith.constant 0 : index
    %c0_13 = arith.constant 0 : index
    %26 = vector.load %arg6[%c0_12, %c0_13] : memref<32x128xf32, #tpu.memory_space<vmem>>, vector<32x128xf32>
    %27 = vector.shape_cast %25 : vector<32x128xf32> to vector<1x32x128xf32>
    %cst_14 = arith.constant dense<0.000000e+00> : vector<32x128xf32>
    %28 = vector.multi_reduction <add>, %27, %cst_14 [0] : vector<1x32x128xf32> to vector<32x128xf32>
    %29 = arith.addf %26, %28 : vector<32x128xf32>
    %c0_15 = arith.constant 0 : index
    %c0_16 = arith.constant 0 : index
    %30 = vector.load %arg6[%c0_15, %c0_16] : memref<32x128xf32, #tpu.memory_space<vmem>>, vector<32x128xf32>
    tpu.vector_store %arg6[%c0_15, %c0_16], %29 {strides = array<i32>} : memref<32x128xf32, #tpu.memory_space<vmem>>, vector<32x128xf32>,
    return
  }
  func.func @transform_0(%arg0: i32, %arg1: i32) -> (i32, i32) {
    %c1_i32 = arith.constant 1 : i32
    %0 = arith.muli %arg0, %c1_i32 : i32
    %1 = arith.addi %0, %arg1 : i32
    %c0_i32 = arith.constant 0 : i32
    %c0_i32_0 = arith.constant 0 : i32
    return %1, %c0_i32 : i32, i32
  }
  func.func @transform_1(%arg0: i32, %arg1: i32) -> (i32, i32) {
    %c1_i32 = arith.constant 1 : i32
    %0 = arith.muli %arg0, %c1_i32 : i32
    %1 = arith.addi %0, %arg1 : i32
    %c0_i32 = arith.constant 0 : i32
    %c0_i32_0 = arith.constant 0 : i32
    return %1, %c0_i32 : i32, i32
  }
  func.func @transform_2(%arg0: i32, %arg1: i32) -> (i32, i32) {
    %c1_i32 = arith.constant 1 : i32
    %0 = arith.muli %arg0, %c1_i32 : i32
    %1 = arith.addi %0, %arg1 : i32
    %c0_i32 = arith.constant 0 : i32
    %c0_i32_0 = arith.constant 0 : i32
    return %1, %c0_i32 : i32, i32
  }
  func.func @transform_3(%arg0: i32, %arg1: i32) -> (i32, i32) {
    %c1_i32 = arith.constant 1 : i32
    %0 = arith.muli %arg0, %c1_i32 : i32
    %1 = arith.addi %0, %arg1 : i32
    %c0_i32 = arith.constant 0 : i32
    %c0_i32_0 = arith.constant 0 : i32
    return %1, %c0_i32 : i32, i32
  }
  func.func @transform_4(%arg0: i32, %arg1: i32) -> (i32, i32) {
    %c0_i32 = arith.constant 0 : i32
    %c0_i32_0 = arith.constant 0 : i32
    return %arg0, %c0_i32 : i32, i32
  }
}

</mosaic_0001>

<llo_original>
// kernel: mse_rel_pallas.1
$region0: #{mse_rel_pallas.1}
  #allocation0 [shape = 'u32[]', space=smem, size = 0x4, offset = 0x4, fixed_abs, tag = 'smem constant byte address 0x4 - core index']
  #allocation1 [shape = 'u32[72,128]{1,0:T(1,128)}', space=vmem, size = 0x9000, scoped, tag = 'internal scratch']
  %s0 = inlined_call_operand.vmem [shape: f32[32,128], index: 0, kind: input, shape index: {}]
  %s1 = inlined_call_operand.vmem [shape: f32[32,128], index: 1, kind: input, shape index: {}]
  %s2 = inlined_call_operand.vmem [shape: f32[32,128], index: 2, kind: input, shape index: {}]
  %s3 = inlined_call_operand.vmem [shape: f32[32,128], index: 3, kind: input, shape index: {}]
  %s4 = inlined_call_operand.vmem [shape: f32[32,128], index: 4, kind: output, shape index: {}]
  %s5 = sld [smem:[#allocation0]]
  $region30: #{mse_rel_pallas.1} parent=0
    _
  %s7 = ssub.s32 1, %s5
  %s8 = scalar_select 0, %s7, %s5
  // Predicated region
  $region2: #{mse_rel_pallas.1} parent=0 // pred_check
    _
  $region3: #{mse_rel_pallas.1} parent=0 // pred_check_branch
    %10 = sbr.rel (0) target = $region5
  $region4: #{mse_rel_pallas.1} parent=0 // pred_region
    %s11 = sadd.s32 0, 0
    %s12 = smul.u32 4, %s11
    %p13 = scmp.lt.s32.totalorder %s12, 3
    %s14 = scalar_select %p13, %s12, 3
    %s15 = smul.addr %s14, 8
    %s16 = scalar_lea.vmem %s0, %s15
    %s17 = sadd.s32 0, 0
    %s18 = smul.u32 4, %s17
  $region5: #{mse_rel_pallas.1} parent=0 // pred_fallthru
    _
  // Predicated region
  $region6: #{mse_rel_pallas.1} parent=0 // pred_check
    _
  $region7: #{mse_rel_pallas.1} parent=0 // pred_check_branch
    %20 = sbr.rel (0) target = $region9
  $region8: #{mse_rel_pallas.1} parent=0 // pred_region
    %s21 = sadd.s32 0, 0
    %s22 = smul.u32 4, %s21
    %p23 = scmp.lt.s32.totalorder %s22, 3
    %s24 = scalar_select %p23, %s22, 3
    %s25 = smul.addr %s24, 8
    %s26 = scalar_lea.vmem %s1, %s25
    %s27 = sadd.s32 0, 0
    %s28 = smul.u32 4, %s27
  $region9: #{mse_rel_pallas.1} parent=0 // pred_fallthru
    _
  // Predicated region
  $region10: #{mse_rel_pallas.1} parent=0 // pred_check
    _
  $region11: #{mse_rel_pallas.1} parent=0 // pred_check_branch
    %30 = sbr.rel (0) target = $region13
  $region12: #{mse_rel_pallas.1} parent=0 // pred_region
    %s31 = sadd.s32 0, 0
    %s32 = smul.u32 4, %s31
    %p33 = scmp.lt.s32.totalorder %s32, 3
    %s34 = scalar_select %p33, %s32, 3
    %s35 = smul.addr %s34, 8
    %s36 = scalar_lea.vmem %s2, %s35
    %s37 = sadd.s32 0, 0
    %s38 = smul.u32 4, %s37
  $region13: #{mse_rel_pallas.1} parent=0 // pred_fallthru
    _
  // Predicated region
  $region14: #{mse_rel_pallas.1} parent=0 // pred_check
    _
  $region15: #{mse_rel_pallas.1} parent=0 // pred_check_branch
    %40 = sbr.rel (0) target = $region17
  $region16: #{mse_rel_pallas.1} parent=0 // pred_region
    %s41 = sadd.s32 0, 0
    %s42 = smul.u32 4, %s41
    %p43 = scmp.lt.s32.totalorder %s42, 3
    %s44 = scalar_select %p43, %s42, 3
    %s45 = smul.addr %s44, 8
    %s46 = scalar_lea.vmem %s3, %s45
    %s47 = sadd.s32 0, 0
    %s48 = smul.u32 4, %s47
  $region17: #{mse_rel_pallas.1} parent=0 // pred_fallthru
    _
  %s49 = sadd.s32 0, 0
  %s50 = smul.u32 4, %s49
  %p51 = scmp.lt.s32.totalorder %s50, 3
  %s52 = scalar_select %p51, %s50, 3
  %s53 = smul.addr %s52, 8
  %s54 = scalar_lea.vmem %s0, %s53
  %s55 = sadd.s32 0, 0
  %s56 = smul.u32 4, %s55
  %p57 = scmp.lt.s32.totalorder %s56, 3
  %s58 = scalar_select %p57, %s56, 3
  %s59 = smul.addr %s58, 8
  %s60 = scalar_lea.vmem %s1, %s59
  %s61 = sadd.s32 0, 0
  %s62 = smul.u32 4, %s61
  %p63 = scmp.lt.s32.totalorder %s62, 3
  %s64 = scalar_select %p63, %s62, 3
  %s65 = smul.addr %s64, 8
  %s66 = scalar_lea.vmem %s2, %s65
  %s67 = sadd.s32 0, 0
  %s68 = smul.u32 4, %s67
  %p69 = scmp.lt.s32.totalorder %s68, 3
  %s70 = scalar_select %p69, %s68, 3
  %s71 = smul.addr %s70, 8
  %s72 = scalar_lea.vmem %s3, %s71
  %s73 = sadd.s32 0, 0
  %s74 = smul.u32 4, %s73
  %p75 = scmp.lt.s32.totalorder %s74, 3
  %s76 = scalar_select %p75, %s74, 3
  %s77 = smul.addr %s76, 8
  %s78 = scalar_lea.vmem %s0, %s77
  %s79 = sadd.s32 0, 0
  %s80 = smul.u32 4, %s79
  %s81 = sadd.s32 0, 0
  %s82 = smul.u32 4, %s81
  %p83 = scmp.lt.s32.totalorder %s82, 3
  %s84 = scalar_select %p83, %s82, 3
  %s85 = smul.addr %s84, 8
  %s86 = scalar_lea.vmem %s1, %s85
  %s87 = sadd.s32 0, 0
  %s88 = smul.u32 4, %s87
  %s89 = sadd.s32 0, 0
  %s90 = smul.u32 4, %s89
  %p91 = scmp.lt.s32.totalorder %s90, 3
  %s92 = scalar_select %p91, %s90, 3
  %s93 = smul.addr %s92, 8
  %s94 = scalar_lea.vmem %s2, %s93
  %s95 = sadd.s32 0, 0
  %s96 = smul.u32 4, %s95
  %s97 = sadd.s32 0, 0
  %s98 = smul.u32 4, %s97
  %p99 = scmp.lt.s32.totalorder %s98, 3
  %s100 = scalar_select %p99, %s98, 3
  %s101 = smul.addr %s100, 8
  %s102 = scalar_lea.vmem %s3, %s101
  %s103 = sadd.s32 0, 0
  %s104 = smul.u32 4, %s103
  %p105 = scmp.eq.s32.totalorder 0, 0
  // Predicated region
  $region18: #{mse_rel_pallas.1} parent=0 // pred_check
    %p106 = pneg %p105
  $region19: #{mse_rel_pallas.1} parent=0 // pred_check_branch
    %108 = sbr.rel (%p106) target = $region21
  $region20: #{mse_rel_pallas.1} parent=0 // pred_region
    %109 = vst [vmem:[%s4] sm:$0xff] 0.0
    %110 = vst [vmem:[%s4 + $0x8] sm:$0xff] 0.0
    %111 = vst [vmem:[%s4 + $0x10] sm:$0xff] 0.0
    %112 = vst [vmem:[%s4 + $0x18] sm:$0xff] 0.0
  $region21: #{mse_rel_pallas.1} parent=0 // pred_fallthru
    _
  %v113 = vld [vmem:[%s78] sm:$0xff]
  %v114 = vld [vmem:[%s78 + $0x8] sm:$0xff]
  %v115 = vld [vmem:[%s78 + $0x10] sm:$0xff]
  %v116 = vld [vmem:[%s78 + $0x18] sm:$0xff]
  %v117 = vld [vmem:[%s86] sm:$0xff]
  %v118 = vld [vmem:[%s86 + $0x8] sm:$0xff]
  %v119 = vld [vmem:[%s86 + $0x10] sm:$0xff]
  %v120 = vld [vmem:[%s86 + $0x18] sm:$0xff]
  %v121 = vld [vmem:[%s94] sm:$0xff]
  %v122 = vld [vmem:[%s94 + $0x8] sm:$0xff]
  %v123 = vld [vmem:[%s94 + $0x10] sm:$0xff]
  %v124 = vld [vmem:[%s94 + $0x18] sm:$0xff]
  %v125 = vld [vmem:[%s102] sm:$0xff]
  %v126 = vld [vmem:[%s102 + $0x8] sm:$0xff]
  %v127 = vld [vmem:[%s102 + $0x10] sm:$0xff]
  %v128 = vld [vmem:[%s102 + $0x18] sm:$0xff]
  %v129 = vxor.u32 %v113, 2147483648
  %v130 = vxor.u32 %v114, 2147483648
  %v131 = vxor.u32 %v115, 2147483648
  %v132 = vxor.u32 %v116, 2147483648
  %v133 = vmul.f32 %v129, 1.442695
  %v134 = vpow.pop %v133
  %v135 = vmul.f32 %v130, 1.442695
  %v136 = vpow.pop %v135
  %v137 = vmul.f32 %v131, 1.442695
  %v138 = vpow.pop %v137
  %v139 = vmul.f32 %v132, 1.442695
  %v140 = vpow.pop %v139
  %v141 = vadd.f32 %v134, 1.0
  %v142 = vadd.f32 %v136, 1.0
  %v143 = vadd.f32 %v138, 1.0
  %v144 = vadd.f32 %v140, 1.0
  %v145 = vrcp.pop %v141
  %v146 = vmul.f32 %v141, %v145
  %v147 = vsub.f32 1.0, %v146
  %v148 = vmul.f32 %v145, %v147
  %v149 = vadd.f32 %v145, %v148
  %vm150 = vweird.f32 %v141
  %vm151 = vweird.f32 %v145
  %vm152 = vmor %vm150, %vm151
  %v153 = vsel %vm152, %v145, %v149
  %v154 = vand.u32 2147483647, %v141
  %vm155 = vcmp.eq.f32.partialorder %v154, 8.507059e+37
  %v156 = vand.u32 %v141, 2147483648
  %v157 = vor.u32 1.1754944e-38, %v156
  %v158 = vsel %vm155, %v157, %v153
  %v159 = vmul.f32 1.0, %v158
  %v160 = vrcp.pop %v142
  %v161 = vmul.f32 %v142, %v160
  %v162 = vsub.f32 1.0, %v161
  %v163 = vmul.f32 %v160, %v162
  %v164 = vadd.f32 %v160, %v163
  %vm165 = vweird.f32 %v142
  %vm166 = vweird.f32 %v160
  %vm167 = vmor %vm165, %vm166
  %v168 = vsel %vm167, %v160, %v164
  %v169 = vand.u32 2147483647, %v142
  %vm170 = vcmp.eq.f32.partialorder %v169, 8.507059e+37
  %v171 = vand.u32 %v142, 2147483648
  %v172 = vor.u32 1.1754944e-38, %v171
  %v173 = vsel %vm170, %v172, %v168
  %v174 = vmul.f32 1.0, %v173
  %v175 = vrcp.pop %v143
  %v176 = vmul.f32 %v143, %v175
  %v177 = vsub.f32 1.0, %v176
  %v178 = vmul.f32 %v175, %v177
  %v179 = vadd.f32 %v175, %v178
  %vm180 = vweird.f32 %v143
  %vm181 = vweird.f32 %v175
  %vm182 = vmor %vm180, %vm181
  %v183 = vsel %vm182, %v175, %v179
  %v184 = vand.u32 2147483647, %v143
  %vm185 = vcmp.eq.f32.partialorder %v184, 8.507059e+37
  %v186 = vand.u32 %v143, 2147483648
  %v187 = vor.u32 1.1754944e-38, %v186
  %v188 = vsel %vm185, %v187, %v183
  %v189 = vmul.f32 1.0, %v188
  %v190 = vrcp.pop %v144
  %v191 = vmul.f32 %v144, %v190
  %v192 = vsub.f32 1.0, %v191
  %v193 = vmul.f32 %v190, %v192
  %v194 = vadd.f32 %v190, %v193
  %vm195 = vweird.f32 %v144
  %vm196 = vweird.f32 %v190
  %vm197 = vmor %vm195, %vm196
  %v198 = vsel %vm197, %v190, %v194
  %v199 = vand.u32 2147483647, %v144
  %vm200 = vcmp.eq.f32.partialorder %v199, 8.507059e+37
  %v201 = vand.u32 %v144, 2147483648
  %v202 = vor.u32 1.1754944e-38, %v201
  %v203 = vsel %vm200, %v202, %v198
  %v204 = vmul.f32 1.0, %v203
  %v205 = vadd.f32 %v159, 1.0
  %v206 = vadd.f32 %v174, 1.0
  %v207 = vadd.f32 %v189, 1.0
  %v208 = vadd.f32 %v204, 1.0
  %v209 = vsub.f32 1.0, %v159
  %v210 = vsub.f32 1.0, %v174
  %v211 = vsub.f32 1.0, %v189
  %v212 = vsub.f32 1.0, %v204
  %v213 = vadd.f32 %v209, 0.001
  %v214 = vadd.f32 %v210, 0.001
  %v215 = vadd.f32 %v211, 0.001
  %v216 = vadd.f32 %v212, 0.001
  %v217 = vrcp.pop %v213
  %v218 = vmul.f32 %v213, %v217
  %v219 = vsub.f32 1.0, %v218
  %v220 = vmul.f32 %v217, %v219
  %v221 = vadd.f32 %v217, %v220
  %vm222 = vweird.f32 %v213
  %vm223 = vweird.f32 %v217
  %vm224 = vmor %vm222, %vm223
  %v225 = vsel %vm224, %v217, %v221
  %v226 = vand.u32 2147483647, %v213
  %vm227 = vcmp.eq.f32.partialorder %v226, 8.507059e+37
  %v228 = vand.u32 %v213, 2147483648
  %v229 = vor.u32 1.1754944e-38, %v228
  %v230 = vsel %vm227, %v229, %v225
  %v231 = vmul.f32 %v205, %v230
  %v232 = vrcp.pop %v214
  %v233 = vmul.f32 %v214, %v232
  %v234 = vsub.f32 1.0, %v233
  %v235 = vmul.f32 %v232, %v234
  %v236 = vadd.f32 %v232, %v235
  %vm237 = vweird.f32 %v214
  %vm238 = vweird.f32 %v232
  %vm239 = vmor %vm237, %vm238
  %v240 = vsel %vm239, %v232, %v236
  %v241 = vand.u32 2147483647, %v214
  %vm242 = vcmp.eq.f32.partialorder %v241, 8.507059e+37
  %v243 = vand.u32 %v214, 2147483648
  %v244 = vor.u32 1.1754944e-38, %v243
  %v245 = vsel %vm242, %v244, %v240
  %v246 = vmul.f32 %v206, %v245
  %v247 = vrcp.pop %v215
  %v248 = vmul.f32 %v215, %v247
  %v249 = vsub.f32 1.0, %v248
  %v250 = vmul.f32 %v247, %v249
  %v251 = vadd.f32 %v247, %v250
  %vm252 = vweird.f32 %v215
  %vm253 = vweird.f32 %v247
  %vm254 = vmor %vm252, %vm253
  %v255 = vsel %vm254, %v247, %v251
  %v256 = vand.u32 2147483647, %v215
  %vm257 = vcmp.eq.f32.partialorder %v256, 8.507059e+37
  %v258 = vand.u32 %v215, 2147483648
  %v259 = vor.u32 1.1754944e-38, %v258
  %v260 = vsel %vm257, %v259, %v255
  %v261 = vmul.f32 %v207, %v260
  %v262 = vrcp.pop %v216
  %v263 = vmul.f32 %v216, %v262
  %v264 = vsub.f32 1.0, %v263
  %v265 = vmul.f32 %v262, %v264
  %v266 = vadd.f32 %v262, %v265
  %vm267 = vweird.f32 %v216
  %vm268 = vweird.f32 %v262
  %vm269 = vmor %vm267, %vm268
  %v270 = vsel %vm269, %v262, %v266
  %v271 = vand.u32 2147483647, %v216
  %vm272 = vcmp.eq.f32.partialorder %v271, 8.507059e+37
  %v273 = vand.u32 %v216, 2147483648
  %v274 = vor.u32 1.1754944e-38, %v273
  %v275 = vsel %vm272, %v274, %v270
  %v276 = vmul.f32 %v208, %v275
  %v277 = vlog2.pop %v231
  %v278 = vmul.f32 %v277, 0.6931472
  %v279 = vlog2.pop %v246
  %v280 = vmul.f32 %v279, 0.6931472
  %v281 = vlog2.pop %v261
  %v282 = vmul.f32 %v281, 0.6931472
  %v283 = vlog2.pop %v276
  %v284 = vmul.f32 %v283, 0.6931472
  %v285 = vmul.f32 %v117, %v278
  %v286 = vmul.f32 %v118, %v280
  %v287 = vmul.f32 %v119, %v282
  %v288 = vmul.f32 %v120, %v284
  %v289 = vmax.f32 %v285, 0.0
  %v290 = vmax.f32 %v286, 0.0
  %v291 = vmax.f32 %v287, 0.0
  %v292 = vmax.f32 %v288, 0.0
  %v293 = vmin.f32 %v289, %v125
  %v294 = vmin.f32 %v290, %v126
  %v295 = vmin.f32 %v291, %v127
  %v296 = vmin.f32 %v292, %v128
  %v297 = vsub.f32 %v293, %v121
  %v298 = vsub.f32 %v294, %v122
  %v299 = vsub.f32 %v295, %v123
  %v300 = vsub.f32 %v296, %v124
  %v301 = vmul.f32 %v297, %v297
  %v302 = vmul.f32 %v298, %v298
  %v303 = vmul.f32 %v299, %v299
  %v304 = vmul.f32 %v300, %v300
  %v305 = vld [vmem:[%s4] sm:$0xff]
  %v306 = vld [vmem:[%s4 + $0x8] sm:$0xff]
  %v307 = vld [vmem:[%s4 + $0x10] sm:$0xff]
  %v308 = vld [vmem:[%s4 + $0x18] sm:$0xff]
  %v309 = vadd.f32 %v301, 0.0
  %v310 = vadd.f32 %v302, 0.0
  %v311 = vadd.f32 %v303, 0.0
  %v312 = vadd.f32 %v304, 0.0
  %v313 = vadd.f32 %v305, %v309
  %v314 = vadd.f32 %v306, %v310
  %v315 = vadd.f32 %v307, %v311
  %v316 = vadd.f32 %v308, %v312
  %317 = vst [vmem:[%s4] sm:$0xff] %v313
  %318 = vst [vmem:[%s4 + $0x8] sm:$0xff] %v314
  %319 = vst [vmem:[%s4 + $0x10] sm:$0xff] %v315
  %320 = vst [vmem:[%s4 + $0x18] sm:$0xff] %v316
  // Predicated region
  $region22: #{mse_rel_pallas.1} parent=0 // pred_check
    _
  $region23: #{mse_rel_pallas.1} parent=0 // pred_check_branch
    %322 = sbr.rel (0) target = $region25
  $region24: #{mse_rel_pallas.1} parent=0 // pred_region
    _
  $region25: #{mse_rel_pallas.1} parent=0 // pred_fallthru
    _
  // Predicated region
  $region26: #{mse_rel_pallas.1} parent=0 // pred_check
    _
  $region27: #{mse_rel_pallas.1} parent=0 // pred_check_branch
    %324 = sbr.rel (0) target = $region29
  $region28: #{mse_rel_pallas.1} parent=0 // pred_region
    _
  $region29: #{mse_rel_pallas.1} parent=0 // pred_fallthru
    _

</llo_original>
